<compile_context>
chip_gen: v5e
topology: v5e:2x2
jax: 0.10.0
libtpu: 0.0.40
codegen_flags: <defaults>
</compile_context>

<pallas_src>
import jax
import jax.numpy as jnp
from jax.experimental import pallas as pl
from jax.experimental.pallas import tpu as pltpu


def _round_up(x, m):
    return (x + m - 1) // m * m


def _smape_kernel(f_ref, t_ref, m_ref, out_ref):
    """One batch tile: un-normalized partial sMAPE sum, lane-dense (1,128) output."""
    f = f_ref[...].astype(jnp.float32)   # (TB, T)
    y = t_ref[...].astype(jnp.float32)   # (TB, T)
    m = m_ref[...].astype(jnp.float32)   # (TB, T)

    num = jnp.abs(f - y)
    den = jnp.abs(f) + jnp.abs(y)
    # divide_no_nan: num/den is NaN only when den == 0 (then num == 0 too), and
    # never +inf for den > 0 since num <= den. A denominator predicate is exact.
    safe = den > 0.0
    inv = pl.reciprocal(jnp.where(safe, den, 1.0), approx=True)   # EUP
    term = jnp.where(safe, num * inv, 0.0) * m                    # (TB, T)

    part = jnp.sum(term, axis=-1, keepdims=True)      # (TB, 1) lane reduce (XLU)
    part = jnp.sum(part, axis=0, keepdims=True)       # (1, 1)
    out_ref[...] = jnp.broadcast_to(part, out_ref.shape)  # lane-dense store


# Per-input f32 elements per batch tile (~1 MiB per buffer; 3 inputs x 2
# pipeline buffers ~ 6 MiB, comfortably inside the scoped VMEM limit).
_MAX_TILE_ELEMS = 256 * 1024


def smape_loss(insample, freq, forecast, target, mask, *, batch_tile=None):
    """Pallas sMAPE: 200 * mean(divide_no_nan(|f-t|, |f|+|t|) * mask). Scalar f32."""
    del insample, freq  # unused by sMAPE (kept for PyTorch signature parity)
    B, T = forecast.shape

    if batch_tile is None:
        tb = max(8, (_MAX_TILE_ELEMS // max(T, 1)) // 8 * 8)
        batch_tile = min(tb, _round_up(B, 8))
    batch_tile = max(8, _round_up(batch_tile, 8))

    B_pad = _round_up(B, batch_tile)
    if B_pad != B:
        pad = ((0, B_pad - B), (0, 0))
        # Zero padding is exact: padded rows have den == 0 -> contribute 0.
        forecast = jnp.pad(forecast, pad)
        target = jnp.pad(target, pad)
        mask = jnp.pad(mask, pad)
    num_tiles = B_pad // batch_tile

    partials = pl.pallas_call(
        _smape_kernel,
        out_shape=jax.ShapeDtypeStruct((num_tiles, 128), jnp.float32),
        grid=(num_tiles,),
        in_specs=[pl.BlockSpec((batch_tile, T), lambda i: (i, 0))] * 3,
        out_specs=pl.BlockSpec((1, 128), lambda i: (i, 0)),
        compiler_params=pltpu.CompilerParams(
            dimension_semantics=("parallel",)),
    )(forecast, target, mask)

    # Normalization hoisted out of the hot loop; count uses the ORIGINAL B*T.
    return 200.0 * jnp.sum(partials[:, 0]) / (B * T)


def _smape_ref(forecast, target, mask):
    """Pure-JAX reference (mirrors the PyTorch divide_no_nan behavior)."""
    num = jnp.abs(forecast - target)
    den = jnp.abs(forecast) + jnp.abs(target)
    r = num / den
    r = jnp.where(jnp.isnan(r) | (r == jnp.inf), 0.0, r)
    return 200.0 * jnp.mean(r * mask)


if __name__ == "__main__":
    key = jax.random.PRNGKey(0)
    k1, k2, k3, k4, k5 = jax.random.split(key, 5)

    # (batch, time) shapes consistent with the PyTorch module.
    B, T_i, T_o, freq = 4, 16, 8, 2
    insample = jax.random.normal(k1, (B, T_i), dtype=jnp.float32)
    forecast = jax.random.normal(k2, (B, T_o), dtype=jnp.float32)
    target = jax.random.normal(k3, (B, T_o), dtype=jnp.float32)
    mask = (jax.random.uniform(k4, (B, T_o)) > 0.3).astype(jnp.float32)
    # Exercise divide_no_nan: |f| + |t| == 0 at one position -> term must be 0.
    forecast = forecast.at[0, 0].set(0.0)
    target = target.at[0, 0].set(0.0)

    loss = smape_loss(insample, freq, forecast, target, mask)
    jax.block_until_ready(loss)
    ref = _smape_ref(forecast, target, mask)
    assert jnp.allclose(loss, ref, rtol=5e-3, atol=1e-5), (loss, ref)

    # Second case: batch not a multiple of the tile -> multi-tile grid + padding.
    B2, T2 = 20, 24
    f2 = jax.random.normal(k5, (B2, T2), dtype=jnp.float32)
    t2 = jax.random.normal(k1, (B2, T2), dtype=jnp.float32)
    m2 = (jax.random.uniform(k2, (B2, T2)) > 0.5).astype(jnp.float32)
    loss2 = smape_loss(None, 0, f2, t2, m2, batch_tile=8)
    jax.block_until_ready(loss2)
    ref2 = _smape_ref(f2, t2, m2)
    assert jnp.allclose(loss2, ref2, rtol=5e-3, atol=1e-5), (loss2, ref2)

    print("KERNEL_OK")
</pallas_src>

<mosaic_0001>
module attributes {stable_mosaic.version = 11 : i64} {
  func.func @_smape_kernel(%arg0: i32, %arg1: memref<8x8xf32, #tpu.memory_space<vmem>>, %arg2: memref<8x8xf32, #tpu.memory_space<vmem>>, %arg3: memref<8x8xf32, #tpu.memory_space<vmem>>, %arg4: memref<1x128xf32, #tpu.memory_space<vmem>>) attributes {dimension_semantics = [#tpu.dimension_semantics<parallel>], iteration_bounds = array<i64: 1>, scalar_prefetch = 0 : i64, scratch_operands = 0 : i64, tpu.core_type = #tpu.core_type<tc>, window_params = [{transform_indices = @transform_0, window_bounds = array<i64: 8, 8>}, {transform_indices = @transform_1, window_bounds = array<i64: 8, 8>}, {transform_indices = @transform_2, window_bounds = array<i64: 8, 8>}, {transform_indices = @transform_3, window_bounds = array<i64: 1, 128>}]} {
    %c0 = arith.constant 0 : index
    %c0_0 = arith.constant 0 : index
    %0 = vector.load %arg1[%c0, %c0_0] : memref<8x8xf32, #tpu.memory_space<vmem>>, vector<8x8xf32>
    %c0_1 = arith.constant 0 : index
    %c0_2 = arith.constant 0 : index
    %1 = vector.load %arg2[%c0_1, %c0_2] : memref<8x8xf32, #tpu.memory_space<vmem>>, vector<8x8xf32>
    %c0_3 = arith.constant 0 : index
    %c0_4 = arith.constant 0 : index
    %2 = vector.load %arg3[%c0_3, %c0_4] : memref<8x8xf32, #tpu.memory_space<vmem>>, vector<8x8xf32>
    %3 = arith.subf %0, %1 : vector<8x8xf32>
    %4 = math.absf %3 : vector<8x8xf32>
    %5 = math.absf %0 : vector<8x8xf32>
    %6 = math.absf %1 : vector<8x8xf32>
    %7 = arith.addf %5, %6 : vector<8x8xf32>
    %cst = arith.constant 0.000000e+00 : f32
    %8 = vector.broadcast %cst : f32 to vector<8x8xf32>
    %9 = arith.cmpf ogt, %7, %8 : vector<8x8xf32>
    %cst_5 = arith.constant 1.000000e+00 : f32
    %10 = vector.broadcast %cst_5 : f32 to vector<8x8xf32>
    %11 = arith.select %9, %7, %10 : vector<8x8xi1>, vector<8x8xf32>
    %12 = tpu.reciprocal %11 {approx = true} : vector<8x8xf32> -> vector<8x8xf32>
    %13 = arith.mulf %4, %12 : vector<8x8xf32>
    %cst_6 = arith.constant 0.000000e+00 : f32
    %14 = vector.broadcast %cst_6 : f32 to vector<8x8xf32>
    %15 = arith.select %9, %13, %14 : vector<8x8xi1>, vector<8x8xf32>
    %16 = arith.mulf %15, %2 : vector<8x8xf32>
    %cst_7 = arith.constant dense<0.000000e+00> : vector<8xf32>
    %17 = vector.multi_reduction <add>, %16, %cst_7 [1] : vector<8x8xf32> to vector<8xf32>
    %18 = vector.shape_cast %17 : vector<8xf32> to vector<8x1xf32>
    %cst_8 = arith.constant dense<0.000000e+00> : vector<1xf32>
    %19 = vector.multi_reduction <add>, %18, %cst_8 [0] : vector<8x1xf32> to vector<1xf32>
    %20 = vector.shape_cast %19 : vector<1xf32> to vector<1x1xf32>
    %21 = vector.shape_cast %20 : vector<1x1xf32> to vector<1x1xf32>
    %22 = vector.broadcast %21 : vector<1x1xf32> to vector<1x128xf32>
    %c0_9 = arith.constant 0 : index
    %c0_10 = arith.constant 0 : index
    %23 = vector.load %arg4[%c0_9, %c0_10] : memref<1x128xf32, #tpu.memory_space<vmem>>, vector<1x128xf32>
    tpu.vector_store %arg4[%c0_9, %c0_10], %22 {strides = array<i32>} : memref<1x128xf32, #tpu.memory_space<vmem>>, vector<1x128xf32>,
    return
  }
  func.func @transform_0(%arg0: i32) -> (i32, i32) {
    %c0_i32 = arith.constant 0 : i32
    %c0_i32_0 = arith.constant 0 : i32
    return %arg0, %c0_i32 : i32, i32
  }
  func.func @transform_1(%arg0: i32) -> (i32, i32) {
    %c0_i32 = arith.constant 0 : i32
    %c0_i32_0 = arith.constant 0 : i32
    return %arg0, %c0_i32 : i32, i32
  }
  func.func @transform_2(%arg0: i32) -> (i32, i32) {
    %c0_i32 = arith.constant 0 : i32
    %c0_i32_0 = arith.constant 0 : i32
    return %arg0, %c0_i32 : i32, i32
  }
  func.func @transform_3(%arg0: i32) -> (i32, i32) {
    %c0_i32 = arith.constant 0 : i32
    %c0_i32_0 = arith.constant 0 : i32
    return %arg0, %c0_i32 : i32, i32
  }
}

</mosaic_0001>

<llo_original>
// kernel: tpu_custom_call.1
$region0: #{tpu_custom_call.1}
  #allocation0 [shape = 'u32[]', space=smem, size = 0x4, offset = 0x4, fixed_abs, tag = 'smem constant byte address 0x4 - core index']
  #allocation1 [shape = 'u32[72,128]{1,0:T(1,128)}', space=vmem, size = 0x9000, scoped, tag = 'internal scratch']
  %s0 = inlined_call_operand.hbm [shape: f32[8,8], index: 0, kind: input, shape index: {}]
  %s1 = inlined_call_operand.hbm [shape: f32[8,8], index: 1, kind: input, shape index: {}]
  %s2 = inlined_call_operand.hbm [shape: f32[8,8], index: 2, kind: input, shape index: {}]
  %s3 = inlined_call_operand.hbm [shape: f32[1,128], index: 3, kind: output, shape index: {}]
  %s4 = sld [smem:[#allocation0]]
  $region34: #{tpu_custom_call.1} parent=0
    _
  %s6 = ssub.s32 1, %s4
  %s7 = scalar_select 0, %s6, %s4
  $region1: #{tpu_custom_call.1} parent=0
    #allocation2 [shape = 'u8[4096]{0}', space=vmem, size = 0x1000, scoped, tag = 'input window, operand 0, single buffered']
    #allocation3 [shape = 's32[1]{0}', space=sflag, size = 0x4, scoped, tag = 'scoped memory for tpu_custom_call.1']
    #allocation4 [shape = 's32[1]{0}', space=sflag, size = 0x4, scoped, tag = 'scoped memory for tpu_custom_call.1']
    #allocation5 [shape = 'u8[4096]{0}', space=vmem, size = 0x1000, scoped, tag = 'input window, operand 1, single buffered']
    #allocation6 [shape = 's32[1]{0}', space=sflag, size = 0x4, scoped, tag = 'scoped memory for tpu_custom_call.1']
    #allocation7 [shape = 'u8[4096]{0}', space=vmem, size = 0x1000, scoped, tag = 'input window, operand 2, single buffered']
    #allocation8 [shape = 'u8[512]{0}', space=vmem, size = 0x400, scoped, tag = 'output window, operand 0, single buffered']
    %8 = vsyncpa [#allocation3], 0
    %9 = vsyncpa [#allocation6], 0
    %10 = vsyncpa [#allocation4], 0
    // Predicated region
    $region2: #{tpu_custom_call.1} parent=1 // pred_check
      _
    $region3: #{tpu_custom_call.1} parent=1 // pred_check_branch
      %12 = sbr.rel (0) target = $region5
    $region4: #{tpu_custom_call.1} parent=1 // pred_region
      %14 = vsyncadd [#allocation3], 0
      %s16 = sshll.u32 %s0, 4
      %s17 = int_to_ptr.hbm [resolvable:$true] %s16
      %s18 = sshll.u32 [#allocation2], 4
      %s19 = int_to_ptr.vmem [resolvable:$true] %s18
      %21 = dma.hbm_to_vmem [thread:$0]  %s17, 128, %s19, [#allocation3]
    $region5: #{tpu_custom_call.1} parent=1 // pred_fallthru
      _
    // Predicated region
    $region6: #{tpu_custom_call.1} parent=1 // pred_check
      _
    $region7: #{tpu_custom_call.1} parent=1 // pred_check_branch
      %23 = sbr.rel (0) target = $region9
    $region8: #{tpu_custom_call.1} parent=1 // pred_region
      %25 = vsyncadd [#allocation6], 0
      %s27 = sshll.u32 %s1, 4
      %s28 = int_to_ptr.hbm [resolvable:$true] %s27
      %s29 = sshll.u32 [#allocation5], 4
      %s30 = int_to_ptr.vmem [resolvable:$true] %s29
      %32 = dma.hbm_to_vmem [thread:$0]  %s28, 128, %s30, [#allocation6]
    $region9: #{tpu_custom_call.1} parent=1 // pred_fallthru
      _
    // Predicated region
    $region10: #{tpu_custom_call.1} parent=1 // pred_check
      _
    $region11: #{tpu_custom_call.1} parent=1 // pred_check_branch
      %34 = sbr.rel (0) target = $region13
    $region12: #{tpu_custom_call.1} parent=1 // pred_region
      %36 = vsyncadd [#allocation6], 0
      %s38 = sshll.u32 %s2, 4
      %s39 = int_to_ptr.hbm [resolvable:$true] %s38
      %s40 = sshll.u32 [#allocation7], 4
      %s41 = int_to_ptr.vmem [resolvable:$true] %s40
      %43 = dma.hbm_to_vmem [thread:$0]  %s39, 128, %s41, [#allocation6]
    $region13: #{tpu_custom_call.1} parent=1 // pred_fallthru
      _
    // Predicated region
    $region14: #{tpu_custom_call.1} parent=1 // pred_check
      _
    $region15: #{tpu_custom_call.1} parent=1 // pred_check_branch
      %45 = sbr.rel (0) target = $region17
    $region16: #{tpu_custom_call.1} parent=1 // pred_region
      %47 = dma.done [#allocation3], 128
    $region17: #{tpu_custom_call.1} parent=1 // pred_fallthru
      _
    // Predicated region
    $region18: #{tpu_custom_call.1} parent=1 // pred_check
      _
    $region19: #{tpu_custom_call.1} parent=1 // pred_check_branch
      %49 = sbr.rel (0) target = $region21
    $region20: #{tpu_custom_call.1} parent=1 // pred_region
      %51 = dma.done [#allocation6], 128
    $region21: #{tpu_custom_call.1} parent=1 // pred_fallthru
      _
    // Predicated region
    $region22: #{tpu_custom_call.1} parent=1 // pred_check
      _
    $region23: #{tpu_custom_call.1} parent=1 // pred_check_branch
      %53 = sbr.rel (0) target = $region25
    $region24: #{tpu_custom_call.1} parent=1 // pred_region
      %55 = dma.done [#allocation6], 128
    $region25: #{tpu_custom_call.1} parent=1 // pred_fallthru
      _
    %v56 = vld [vmem:[#allocation2] sm:$0xff]
    %v57 = vld [vmem:[#allocation5] sm:$0xff]
    %v58 = vld [vmem:[#allocation7] sm:$0xff]
    %v59 = vsub.f32 %v56, %v57
    %v60 = vand.u32 2147483647, %v59
    %v61 = vand.u32 2147483647, %v56
    %v62 = vand.u32 2147483647, %v57
    %v63 = vadd.f32 %v61, %v62
    %vm64 = vcmp.gt.f32.partialorder %v63, 0.0
    %v65 = vsel %vm64, %v63, 1.0
    %v66 = vrcp.pop %v65
    %v67 = vmul.f32 %v60, %v66
    %v68 = vsel %vm64, %v67, 0.0
    %v69 = vmul.f32 %v68, %v58
    %vm70 = vcmask 64512
    %v71 = vsel %vm70, %v69, 0.0
    %72 = vadd.xlane.f32.xlu0 %v71
    %v73 = vpop.xlane.xlu0 %72
    %v74 = vrot.slane %v73, 4
    %v75 = vadd.f32 %v73, %v74
    %v76 = vrot.slane %v75, 2
    %v77 = vadd.f32 %v75, %v76
    %v78 = vrot.slane %v77, 1
    %v79 = vadd.f32 %v77, %v78
    %80 = vst [vmem:[#allocation8] sm:$0x1] %v79
    // Predicated region
    $region26: #{tpu_custom_call.1} parent=1 // pred_check
      _
    $region27: #{tpu_custom_call.1} parent=1 // pred_check_branch
      %82 = sbr.rel (0) target = $region29
    $region28: #{tpu_custom_call.1} parent=1 // pred_region
      %84 = vsyncadd [#allocation4], 0
      %s86 = sshll.u32 [#allocation8], 4
      %s87 = int_to_ptr.vmem [resolvable:$true] %s86
      %s88 = sshll.u32 %s3, 4
      %s89 = int_to_ptr.hbm [resolvable:$true] %s88
      %91 = dma.vmem_to_hbm [thread:$0]  %s87, 16, %s89, [#allocation4]
    $region29: #{tpu_custom_call.1} parent=1 // pred_fallthru
      _
    // Predicated region
    $region30: #{tpu_custom_call.1} parent=1 // pred_check
      _
    $region31: #{tpu_custom_call.1} parent=1 // pred_check_branch
      %93 = sbr.rel (0) target = $region33
    $region32: #{tpu_custom_call.1} parent=1 // pred_region
      %95 = dma.done [#allocation4], 16
    $region33: #{tpu_custom_call.1} parent=1 // pred_fallthru
      _
    %96 = vsyncpa [#allocation3], 1
    %97 = vsyncpa [#allocation6], 1
    %98 = vsyncpa [#allocation4], 1

</llo_original>
